<compile_context>
chip_gen: v7x
topology: tpu7x:2x2x1
jax: 0.10.0
libtpu: 0.0.40
codegen_flags: <defaults>
</compile_context>

<pallas_src>
import functools

import jax
import jax.numpy as jnp
from jax.experimental import pallas as pl
from jax.experimental.pallas import tpu as pltpu

LANE = 128


def _round_up(n, m):
    return ((n + m - 1) // m) * m


def _tensorcores_per_chip():
    """Best-effort TC-per-chip query (v5e/v6e: 1, v7x: 2). Safe fallback: 1."""
    try:
        info = pltpu.get_tpu_info()
        for attr in ("tensorcores_per_chip", "num_tensorcores", "core_count", "num_cores"):
            n = getattr(info, attr, None)
            if isinstance(n, int) and 0 < n <= 8:
                return n
    except Exception:
        pass
    try:
        n = getattr(jax.devices()[0], "num_cores", None)
        if isinstance(n, int) and 0 < n <= 8:
            return n
    except Exception:
        pass
    return 1


# ---------------------------------------------------------------------------
# Kernel
# ---------------------------------------------------------------------------
def resblock_kernel(x_ref, w1_ref, b1_ref, w2_ref, b2_ref, w3_ref, b3_ref, o_ref):
    x = x_ref[...]  # (tile_b, in_dim), MXU operand dtype (f32 or bf16)

    # fc1 + ReLU -> identity for the residual (f32 accumulate, f32 elementwise).
    h1 = jnp.dot(x, w1_ref[...], preferred_element_type=jnp.float32) + b1_ref[...]
    h1 = jnp.maximum(h1, 0.0)                       # (tile_b, out_p) f32

    # fc2 + ReLU (cast activation to weight dtype for the MXU, accumulate f32).
    h2 = jnp.dot(h1.astype(w2_ref.dtype), w2_ref[...],
                 preferred_element_type=jnp.float32) + b2_ref[...]
    h2 = jnp.maximum(h2, 0.0)                       # (tile_b, hid_dim) f32

    # fc3
    h3 = jnp.dot(h2.astype(w3_ref.dtype), w3_ref[...],
                 preferred_element_type=jnp.float32) + b3_ref[...]

    # Residual add (identity = ReLU(fc1(x))) + final ReLU; lane-dense f32 store
    # (out_p is a multiple of 128, so no vst.msk partial stores).
    # NOTE(vreg pressure): h1 stays live across both remaining dots; at larger tile_b /
    # feature dims, park it in bf16 or a VMEM scratch if the bundle dump shows spills.
    o_ref[...] = jnp.maximum(h3 + h1, 0.0).astype(o_ref.dtype)


# ---------------------------------------------------------------------------
# Jitted forward (pad batch -> pallas_call -> slice), static tile_b / out_dim.
# ---------------------------------------------------------------------------
@functools.partial(jax.jit, static_argnames=("out_dim", "tile_b"))
def _resblock_jit(x, w1, b1, w2, b2, w3, b3, *, out_dim, tile_b):
    B, in_dim = x.shape
    out_p = w1.shape[1]          # padded output width (multiple of 128)
    hid_dim = w2.shape[1]

    B_p = _round_up(B, tile_b)
    # Pad batch only; cast activations to the MXU operand dtype chosen at init.
    x_p = jnp.pad(x, ((0, B_p - B), (0, 0))).astype(w1.dtype)

    grid = (B_p // tile_b,)

    op_bytes = jnp.dtype(w1.dtype).itemsize
    flops = 2 * B_p * (in_dim * out_p + out_p * hid_dim + hid_dim * out_p)
    bytes_accessed = (
        B_p * in_dim * op_bytes                                          # x
        + (in_dim * out_p + out_p * hid_dim + hid_dim * out_p) * op_bytes  # weights
        + (out_p + hid_dim + out_p) * 4                                  # biases
        + B_p * out_p * 4                                                # output
    )

    out_padded = pl.pallas_call(
        resblock_kernel,
        out_shape=jax.ShapeDtypeStruct((B_p, out_p), jnp.float32),
        grid_spec=pltpu.PrefetchScalarGridSpec(
            num_scalar_prefetch=0,
            grid=grid,
            in_specs=[
                pl.BlockSpec((tile_b, in_dim), lambda i: (i, 0)),   # x tile (full in_dim)
                pl.BlockSpec((in_dim, out_p), lambda i: (0, 0)),    # w1 (resident)
                pl.BlockSpec((1, out_p), lambda i: (0, 0)),         # b1
                pl.BlockSpec((out_p, hid_dim), lambda i: (0, 0)),   # w2 (resident)
                pl.BlockSpec((1, hid_dim), lambda i: (0, 0)),       # b2
                pl.BlockSpec((hid_dim, out_p), lambda i: (0, 0)),   # w3 (resident)
                pl.BlockSpec((1, out_p), lambda i: (0, 0)),         # b3
            ],
            out_specs=pl.BlockSpec((tile_b, out_p), lambda i: (i, 0)),
        ),
        compiler_params=pltpu.CompilerParams(
            dimension_semantics=("parallel",),
            # VMEM footprint at these sizes is tiny; if feature dims grow (resident
            # weights > ~10s of MiB, hit first on v7x's 64 MiB VMEM), raise
            # vmem_limit_bytes and/or add a K-reduction grid axis.
        ),
        cost_estimate=pl.CostEstimate(
            flops=flops, transcendentals=0, bytes_accessed=bytes_accessed),
    )(x_p, w1, b1, w2, b2, w3, b3)

    # Strip batch / lane padding (fused into the same jitted program).
    return out_padded[:B, :out_dim]


def resblock_forward(x, prepared, *, tile_b=None):
    """x: (B, input_dim) float32. prepared: output of prepare_params (padded once)."""
    w1 = prepared["w1"]
    min_rows = 16 if w1.dtype == jnp.bfloat16 else 8
    B = x.shape[0]
    if tile_b is None:
        # One tile per TensorCore: grid=1 on v5e/v6e, grid=2 ("parallel") on v7x.
        cores = _tensorcores_per_chip()
        tile_b = _round_up(pl.cdiv(B, cores), min_rows)
    else:
        tile_b = max(min_rows,
                     _round_up(min(tile_b, _round_up(B, min_rows)), min_rows))
    return _resblock_jit(
        x, prepared["w1"], prepared["b1"], prepared["w2"], prepared["b2"],
        prepared["w3"], prepared["b3"],
        out_dim=prepared["out_dim"], tile_b=tile_b)


# ---------------------------------------------------------------------------
# Params
# ---------------------------------------------------------------------------
def init_params(key, input_dim, hidden_dim, output_dim):
    """Deterministic init mimicking nn.Linear's U(-1/sqrt(fan_in), 1/sqrt(fan_in)).
    Weights stored transposed: (in_features, out_features)."""
    ks = jax.random.split(key, 6)

    def lin(kw, kb, fan_in, fan_out):
        bound = 1.0 / jnp.sqrt(fan_in)
        w = jax.random.uniform(kw, (fan_in, fan_out), jnp.float32, -bound, bound)
        b = jax.random.uniform(kb, (1, fan_out), jnp.float32, -bound, bound)
        return w, b

    w1, b1 = lin(ks[0], ks[1], input_dim, output_dim)
    w2, b2 = lin(ks[2], ks[3], output_dim, hidden_dim)
    w3, b3 = lin(ks[4], ks[5], hidden_dim, output_dim)
    return {"w1": w1, "b1": b1, "w2": w2, "b2": b2, "w3": w3, "b3": b3}


def prepare_params(params, mxu_dtype=jnp.float32):
    """Pad + cast ONCE at init.

    Only the fc output width (out_dim) is padded to a multiple of 128: it is the lane
    dim of the output store, the residual, and the K dim of fc2 (whose extra rows are
    zero, contributing nothing). Contraction dims input_dim / hidden_dim stay unpadded
    (full-extent BlockSpec dims are legal; padding them is dead DMA + dead MXU cycles).
    Weights are cast to the MXU operand dtype; biases stay f32 (f32 accumulate/VPU path).
    """
    w1, b1 = params["w1"], params["b1"]
    w2, b2 = params["w2"], params["b2"]
    w3, b3 = params["w3"], params["b3"]
    out_dim = w1.shape[1]
    pad_o = _round_up(out_dim, LANE) - out_dim
    return {
        "w1": jnp.pad(w1, ((0, 0), (0, pad_o))).astype(mxu_dtype),
        "b1": jnp.pad(b1, ((0, 0), (0, pad_o))).astype(jnp.float32),
        "w2": jnp.pad(w2, ((0, pad_o), (0, 0))).astype(mxu_dtype),
        "b2": b2.astype(jnp.float32),
        "w3": jnp.pad(w3, ((0, 0), (0, pad_o))).astype(mxu_dtype),
        "b3": jnp.pad(b3, ((0, 0), (0, pad_o))).astype(jnp.float32),
        "out_dim": out_dim,
    }


def resblock_reference(x, p):
    h1 = jnp.maximum(x @ p["w1"] + p["b1"], 0.0)
    h2 = jnp.maximum(h1 @ p["w2"] + p["b2"], 0.0)
    h3 = h2 @ p["w3"] + p["b3"]
    return jnp.maximum(h3 + h1, 0.0)


if __name__ == "__main__":
    input_dim, hidden_dim, output_dim = 32, 64, 32
    batch = 256

    key = jax.random.PRNGKey(0)
    kx, kp = jax.random.split(key)
    x = jax.random.normal(kx, (batch, input_dim), jnp.float32)
    params = init_params(kp, input_dim, hidden_dim, output_dim)

    ref = resblock_reference(x, params)

    # f32 MXU operands (default; both kernel and reference use default MXU precision).
    prep_f32 = prepare_params(params, mxu_dtype=jnp.float32)
    out_f32 = jax.block_until_ready(resblock_forward(x, prep_f32))
    assert out_f32.shape == (batch, output_dim)
    assert jnp.allclose(out_f32, ref, atol=1e-5, rtol=1e-5), "f32 mismatch vs reference"

    # bf16 MXU operands, f32 accumulate / bias / ReLU / residual (fast path on v6e/v7x,
    # also valid on v5e since no bf16 VPU ops are used).
    prep_bf16 = prepare_params(params, mxu_dtype=jnp.bfloat16)
    out_bf16 = jax.block_until_ready(resblock_forward(x, prep_bf16))
    assert out_bf16.shape == (batch, output_dim)
    assert jnp.allclose(out_bf16, ref, atol=5e-2, rtol=5e-2), "bf16 mismatch vs reference"

    # Odd batch size: exercises batch padding / slicing without ~2x wasted work.
    x_odd = jax.random.normal(kx, (37, input_dim), jnp.float32)
    out_odd = jax.block_until_ready(resblock_forward(x_odd, prep_f32))
    assert out_odd.shape == (37, output_dim)
    assert jnp.allclose(out_odd, resblock_reference(x_odd, params),
                        atol=1e-5, rtol=1e-5), "odd-batch mismatch vs reference"

    print("KERNEL_OK")
</pallas_src>

<mosaic_0001>
module attributes {stable_mosaic.version = 11 : i64} {
  func.func @resblock_kernel(%arg0: i32, %arg1: memref<256x32xf32, #tpu.memory_space<vmem>>, %arg2: memref<32x128xf32, #tpu.memory_space<vmem>>, %arg3: memref<1x128xf32, #tpu.memory_space<vmem>>, %arg4: memref<128x64xf32, #tpu.memory_space<vmem>>, %arg5: memref<1x64xf32, #tpu.memory_space<vmem>>, %arg6: memref<64x128xf32, #tpu.memory_space<vmem>>, %arg7: memref<1x128xf32, #tpu.memory_space<vmem>>, %arg8: memref<256x128xf32, #tpu.memory_space<vmem>>) attributes {dimension_semantics = [#tpu.dimension_semantics<parallel>], iteration_bounds = array<i64: 1>, scalar_prefetch = 0 : i64, scratch_operands = 0 : i64, tpu.core_type = #tpu.core_type<tc>, window_params = [{transform_indices = @transform_0, window_bounds = array<i64: 256, 32>}, {pipeline_mode = #tpu.pipeline_mode<synchronous>, transform_indices = @transform_1, window_bounds = array<i64: 32, 128>}, {pipeline_mode = #tpu.pipeline_mode<synchronous>, transform_indices = @transform_2, window_bounds = array<i64: 1, 128>}, {pipeline_mode = #tpu.pipeline_mode<synchronous>, transform_indices = @transform_3, window_bounds = array<i64: 128, 64>}, {pipeline_mode = #tpu.pipeline_mode<synchronous>, transform_indices = @transform_4, window_bounds = array<i64: 1, 64>}, {pipeline_mode = #tpu.pipeline_mode<synchronous>, transform_indices = @transform_5, window_bounds = array<i64: 64, 128>}, {pipeline_mode = #tpu.pipeline_mode<synchronous>, transform_indices = @transform_6, window_bounds = array<i64: 1, 128>}, {transform_indices = @transform_7, window_bounds = array<i64: 256, 128>}]} {
    %c0 = arith.constant 0 : index
    %c0_0 = arith.constant 0 : index
    %0 = vector.load %arg1[%c0, %c0_0] : memref<256x32xf32, #tpu.memory_space<vmem>>, vector<256x32xf32>
    %c0_1 = arith.constant 0 : index
    %c0_2 = arith.constant 0 : index
    %1 = vector.load %arg2[%c0_1, %c0_2] : memref<32x128xf32, #tpu.memory_space<vmem>>, vector<32x128xf32>
    %cst = arith.constant dense<0.000000e+00> : vector<256x128xf32>
    %2 = tpu.matmul %0, %1, %cst {dimension_numbers = #tpu.dot_dimension_numbers<[1], [0], [0], [1], [0, 0, 1, 1], [], []>} : vector<256x32xf32>, vector<32x128xf32>, vector<256x128xf32> -> vector<256x128xf32>
    %c0_3 = arith.constant 0 : index
    %c0_4 = arith.constant 0 : index
    %3 = vector.load %arg3[%c0_3, %c0_4] : memref<1x128xf32, #tpu.memory_space<vmem>>, vector<1x128xf32>
    %4 = vector.broadcast %3 : vector<1x128xf32> to vector<256x128xf32>
    %5 = arith.addf %2, %4 : vector<256x128xf32>
    %cst_5 = arith.constant 0.000000e+00 : f32
    %6 = vector.broadcast %cst_5 : f32 to vector<256x128xf32>
    %7 = arith.maximumf %5, %6 : vector<256x128xf32>
    %c0_6 = arith.constant 0 : index
    %c0_7 = arith.constant 0 : index
    %8 = vector.load %arg4[%c0_6, %c0_7] : memref<128x64xf32, #tpu.memory_space<vmem>>, vector<128x64xf32>
    %cst_8 = arith.constant dense<0.000000e+00> : vector<256x64xf32>
    %9 = tpu.matmul %7, %8, %cst_8 {dimension_numbers = #tpu.dot_dimension_numbers<[1], [0], [0], [1], [0, 0, 1, 1], [], []>} : vector<256x128xf32>, vector<128x64xf32>, vector<256x64xf32> -> vector<256x64xf32>
    %c0_9 = arith.constant 0 : index
    %c0_10 = arith.constant 0 : index
    %10 = vector.load %arg5[%c0_9, %c0_10] : memref<1x64xf32, #tpu.memory_space<vmem>>, vector<1x64xf32>
    %11 = vector.broadcast %10 : vector<1x64xf32> to vector<256x64xf32>
    %12 = arith.addf %9, %11 : vector<256x64xf32>
    %cst_11 = arith.constant 0.000000e+00 : f32
    %13 = vector.broadcast %cst_11 : f32 to vector<256x64xf32>
    %14 = arith.maximumf %12, %13 : vector<256x64xf32>
    %c0_12 = arith.constant 0 : index
    %c0_13 = arith.constant 0 : index
    %15 = vector.load %arg6[%c0_12, %c0_13] : memref<64x128xf32, #tpu.memory_space<vmem>>, vector<64x128xf32>
    %cst_14 = arith.constant dense<0.000000e+00> : vector<256x128xf32>
    %16 = tpu.matmul %14, %15, %cst_14 {dimension_numbers = #tpu.dot_dimension_numbers<[1], [0], [0], [1], [0, 0, 1, 1], [], []>} : vector<256x64xf32>, vector<64x128xf32>, vector<256x128xf32> -> vector<256x128xf32>
    %c0_15 = arith.constant 0 : index
    %c0_16 = arith.constant 0 : index
    %17 = vector.load %arg7[%c0_15, %c0_16] : memref<1x128xf32, #tpu.memory_space<vmem>>, vector<1x128xf32>
    %18 = vector.broadcast %17 : vector<1x128xf32> to vector<256x128xf32>
    %19 = arith.addf %16, %18 : vector<256x128xf32>
    %20 = arith.addf %19, %7 : vector<256x128xf32>
    %cst_17 = arith.constant 0.000000e+00 : f32
    %21 = vector.broadcast %cst_17 : f32 to vector<256x128xf32>
    %22 = arith.maximumf %20, %21 : vector<256x128xf32>
    %c0_18 = arith.constant 0 : index
    %c0_19 = arith.constant 0 : index
    %23 = vector.load %arg8[%c0_18, %c0_19] : memref<256x128xf32, #tpu.memory_space<vmem>>, vector<256x128xf32>
    tpu.vector_store %arg8[%c0_18, %c0_19], %22 {strides = array<i32>} : memref<256x128xf32, #tpu.memory_space<vmem>>, vector<256x128xf32>,
    return
  }
  func.func @transform_0(%arg0: i32) -> (i32, i32) {
    %c0_i32 = arith.constant 0 : i32
    %c0_i32_0 = arith.constant 0 : i32
    return %arg0, %c0_i32 : i32, i32
  }
  func.func @transform_1(%arg0: i32) -> (i32, i32) {
    %c0_i32 = arith.constant 0 : i32
    %c0_i32_0 = arith.constant 0 : i32
    %c0_i32_1 = arith.constant 0 : i32
    return %c0_i32, %c0_i32_0 : i32, i32
  }
  func.func @transform_2(%arg0: i32) -> (i32, i32) {
    %c0_i32 = arith.constant 0 : i32
    %c0_i32_0 = arith.constant 0 : i32
    %c0_i32_1 = arith.constant 0 : i32
    return %c0_i32, %c0_i32_0 : i32, i32
  }
  func.func @transform_3(%arg0: i32) -> (i32, i32) {
    %c0_i32 = arith.constant 0 : i32
    %c0_i32_0 = arith.constant 0 : i32
    %c0_i32_1 = arith.constant 0 : i32
    return %c0_i32, %c0_i32_0 : i32, i32
  }
  func.func @transform_4(%arg0: i32) -> (i32, i32) {
    %c0_i32 = arith.constant 0 : i32
    %c0_i32_0 = arith.constant 0 : i32
    %c0_i32_1 = arith.constant 0 : i32
    return %c0_i32, %c0_i32_0 : i32, i32
  }
  func.func @transform_5(%arg0: i32) -> (i32, i32) {
    %c0_i32 = arith.constant 0 : i32
    %c0_i32_0 = arith.constant 0 : i32
    %c0_i32_1 = arith.constant 0 : i32
    return %c0_i32, %c0_i32_0 : i32, i32
  }
  func.func @transform_6(%arg0: i32) -> (i32, i32) {
    %c0_i32 = arith.constant 0 : i32
    %c0_i32_0 = arith.constant 0 : i32
    %c0_i32_1 = arith.constant 0 : i32
    return %c0_i32, %c0_i32_0 : i32, i32
  }
  func.func @transform_7(%arg0: i32) -> (i32, i32) {
    %c0_i32 = arith.constant 0 : i32
    %c0_i32_0 = arith.constant 0 : i32
    return %arg0, %c0_i32 : i32, i32
  }
}

</mosaic_0001>

<llo_original>
// kernel: _resblock_jit.1
$region0: #{_resblock_jit.1}
  #allocation0 [shape = 'u32[]', space=smem, size = 0x4, offset = 0x4, fixed_abs, tag = 'smem constant byte address 0x4 - core index']
  #allocation1 [shape = 'u32[144,128]{1,0:T(1,128)}', space=vmem, size = 0x12000, scoped, tag = 'internal scratch']
  %s0 = inlined_call_operand.vmem [shape: f32[256,32], index: 0, kind: input, shape index: {}]
  %s1 = inlined_call_operand.vmem [shape: f32[32,128], index: 1, kind: input, shape index: {}]
  %s2 = inlined_call_operand.vmem [shape: f32[1,128], index: 2, kind: input, shape index: {}]
  %s3 = inlined_call_operand.vmem [shape: f32[128,64], index: 3, kind: input, shape index: {}]
  %s4 = inlined_call_operand.vmem [shape: f32[1,64], index: 4, kind: input, shape index: {}]
  %s5 = inlined_call_operand.vmem [shape: f32[64,128], index: 5, kind: input, shape index: {}]
  %s6 = inlined_call_operand.vmem [shape: f32[1,128], index: 6, kind: input, shape index: {}]
  %s7 = inlined_call_operand.vmem [shape: f32[256,128], index: 7, kind: output, shape index: {}]
  %s8 = sld [smem:[#allocation0]]
  $region38: #{_resblock_jit.1} parent=0
    _
  %s10 = ssub.s32 1, %s8
  %s11 = scalar_select 0, %s10, %s8
  // Predicated region
  $region2: #{_resblock_jit.1} parent=0 // pred_check
    _
  $region3: #{_resblock_jit.1} parent=0 // pred_check_branch
    %13 = sbr.rel (0) target = $region5
  $region4: #{_resblock_jit.1} parent=0 // pred_region
    _
  $region5: #{_resblock_jit.1} parent=0 // pred_fallthru
    _
  // Predicated region
  $region6: #{_resblock_jit.1} parent=0 // pred_check
    _
  $region7: #{_resblock_jit.1} parent=0 // pred_check_branch
    %15 = sbr.rel (0) target = $region9
  $region8: #{_resblock_jit.1} parent=0 // pred_region
    _
  $region9: #{_resblock_jit.1} parent=0 // pred_fallthru
    _
  // Predicated region
  $region10: #{_resblock_jit.1} parent=0 // pred_check
    _
  $region11: #{_resblock_jit.1} parent=0 // pred_check_branch
    %17 = sbr.rel (0) target = $region13
  $region12: #{_resblock_jit.1} parent=0 // pred_region
    _
  $region13: #{_resblock_jit.1} parent=0 // pred_fallthru
    _
  // Predicated region
  $region14: #{_resblock_jit.1} parent=0 // pred_check
    _
  $region15: #{_resblock_jit.1} parent=0 // pred_check_branch
    %19 = sbr.rel (0) target = $region17
  $region16: #{_resblock_jit.1} parent=0 // pred_region
    _
  $region17: #{_resblock_jit.1} parent=0 // pred_fallthru
    _
  // Predicated region
  $region18: #{_resblock_jit.1} parent=0 // pred_check
    _
  $region19: #{_resblock_jit.1} parent=0 // pred_check_branch
    %21 = sbr.rel (0) target = $region21
  $region20: #{_resblock_jit.1} parent=0 // pred_region
    _
  $region21: #{_resblock_jit.1} parent=0 // pred_fallthru
    _
  // Predicated region
  $region22: #{_resblock_jit.1} parent=0 // pred_check
    _
  $region23: #{_resblock_jit.1} parent=0 // pred_check_branch
    %23 = sbr.rel (0) target = $region25
  $region24: #{_resblock_jit.1} parent=0 // pred_region
    _
  $region25: #{_resblock_jit.1} parent=0 // pred_fallthru
    _
  // Predicated region
  $region26: #{_resblock_jit.1} parent=0 // pred_check
    _
  $region27: #{_resblock_jit.1} parent=0 // pred_check_branch
    %25 = sbr.rel (0) target = $region29
  $region28: #{_resblock_jit.1} parent=0 // pred_region
    _
  $region29: #{_resblock_jit.1} parent=0 // pred_fallthru
    _
  %v26 = vld [vmem:[%s0] sm:$0xff]
  %v27 = vld [vmem:[%s0 + $0x8] sm:$0xff]
  %v28 = vld [vmem:[%s0 + $0x10] sm:$0xff]
  %v29 = vld [vmem:[%s0 + $0x18] sm:$0xff]
  %v30 = vld [vmem:[%s0 + $0x20] sm:$0xff]
  %v31 = vld [vmem:[%s0 + $0x28] sm:$0xff]
  %v32 = vld [vmem:[%s0 + $0x30] sm:$0xff]
  %v33 = vld [vmem:[%s0 + $0x38] sm:$0xff]
  %v34 = vld [vmem:[%s0 + $0x40] sm:$0xff]
  %v35 = vld [vmem:[%s0 + $0x48] sm:$0xff]
  %v36 = vld [vmem:[%s0 + $0x50] sm:$0xff]
  %v37 = vld [vmem:[%s0 + $0x58] sm:$0xff]
  %v38 = vld [vmem:[%s0 + $0x60] sm:$0xff]
  %v39 = vld [vmem:[%s0 + $0x68] sm:$0xff]
  %v40 = vld [vmem:[%s0 + $0x70] sm:$0xff]
  %v41 = vld [vmem:[%s0 + $0x78] sm:$0xff]
  %v42 = vld [vmem:[%s0 + $0x80] sm:$0xff]
  %v43 = vld [vmem:[%s0 + $0x88] sm:$0xff]
  %v44 = vld [vmem:[%s0 + $0x90] sm:$0xff]
  %v45 = vld [vmem:[%s0 + $0x98] sm:$0xff]
  %v46 = vld [vmem:[%s0 + $0xa0] sm:$0xff]
  %v47 = vld [vmem:[%s0 + $0xa8] sm:$0xff]
  %v48 = vld [vmem:[%s0 + $0xb0] sm:$0xff]
  %v49 = vld [vmem:[%s0 + $0xb8] sm:$0xff]
  %v50 = vld [vmem:[%s0 + $0xc0] sm:$0xff]
  %v51 = vld [vmem:[%s0 + $0xc8] sm:$0xff]
  %v52 = vld [vmem:[%s0 + $0xd0] sm:$0xff]
  %v53 = vld [vmem:[%s0 + $0xd8] sm:$0xff]
  %v54 = vld [vmem:[%s0 + $0xe0] sm:$0xff]
  %v55 = vld [vmem:[%s0 + $0xe8] sm:$0xff]
  %v56 = vld [vmem:[%s0 + $0xf0] sm:$0xff]
  %v57 = vld [vmem:[%s0 + $0xf8] sm:$0xff]
  %v58 = vld [vmem:[%s1] sm:$0xff]
  %v59 = vld [vmem:[%s1 + $0x8] sm:$0xff]
  %v60 = vld [vmem:[%s1 + $0x10] sm:$0xff]
  %v61 = vld [vmem:[%s1 + $0x18] sm:$0xff]
  %v62 = vld [vmem:[%s2] sm:$0x1]
  %v64 = vlaneseq
  %v65 = vshrl.u32 %v64, 7
  %v66 = vsub.s32 0, %v65
  %v67 = vrot.slane %v62, %v66
  %vm69 = vcmask 261120
  %v71 = vsel %vm69, %v26, 0
  %v74 = vsel %vm69, %v27, 0
  %v77 = vsel %vm69, %v28, 0
  %v80 = vsel %vm69, %v29, 0
  %v83 = vsel %vm69, %v30, 0
  %v86 = vsel %vm69, %v31, 0
  %v89 = vsel %vm69, %v32, 0
  %v92 = vsel %vm69, %v33, 0
  %v95 = vsel %vm69, %v34, 0
  %v98 = vsel %vm69, %v35, 0
  %v101 = vsel %vm69, %v36, 0
  %v104 = vsel %vm69, %v37, 0
  %v107 = vsel %vm69, %v38, 0
  %v110 = vsel %vm69, %v39, 0
  %v113 = vsel %vm69, %v40, 0
  %v116 = vsel %vm69, %v41, 0
  %v119 = vsel %vm69, %v42, 0
  %v122 = vsel %vm69, %v43, 0
  %v125 = vsel %vm69, %v44, 0
  %v128 = vsel %vm69, %v45, 0
  %v131 = vsel %vm69, %v46, 0
  %v134 = vsel %vm69, %v47, 0
  %v137 = vsel %vm69, %v48, 0
  %v140 = vsel %vm69, %v49, 0
  %v143 = vsel %vm69, %v50, 0
  %v146 = vsel %vm69, %v51, 0
  %v149 = vsel %vm69, %v52, 0
  %v152 = vsel %vm69, %v53, 0
  %v155 = vsel %vm69, %v54, 0
  %v158 = vsel %vm69, %v55, 0
  %v161 = vsel %vm69, %v56, 0
  %v164 = vsel %vm69, %v57, 0
  %166 = vmatprep.subr.mxu0 0.0
  %167 = vmatpush1.msra.mxu0 %v58
  %168 = vmatprep.subr.mxu0 0.0
  %169 = vmatpush1.msra.mxu0 %v59
  %170 = vmatprep.subr.mxu0 0.0
  %171 = vmatpush1.msra.mxu0 %v60
  %172 = vmatprep.subr.mxu0 0.0
  %173 = vmatpush1.msra.mxu0 %v61
  %174 = vmatprep.subr.mxu0 0.0
  %175 = vmatpush1.msra.mxu0 0.0
  %176 = vmatprep.subr.mxu0 0.0
  %177 = vmatpush1.msra.mxu0 0.0
  %178 = vmatprep.subr.mxu0 0.0
  %179 = vmatpush1.msra.mxu0 0.0
  %180 = vmatprep.subr.mxu0 0.0
  %181 = vmatpush1.msra.mxu0 0.0
  %182 = vmatprep.subr.mxu0 0.0
  %183 = vmatpush1.msra.mxu0 0.0
  %184 = vmatprep.subr.mxu0 0.0
  %185 = vmatpush1.msra.mxu0 0.0
  %186 = vmatprep.subr.mxu0 0.0
  %187 = vmatpush1.msra.mxu0 0.0
  %188 = vmatprep.subr.mxu0 0.0
  %189 = vmatpush1.msra.mxu0 0.0
  %190 = vmatprep.subr.mxu0 0.0
  %191 = vmatpush1.msra.mxu0 0.0
  %192 = vmatprep.subr.mxu0 0.0
  %193 = vmatpush1.msra.mxu0 0.0
  %194 = vmatprep.subr.mxu0 0.0
  %195 = vmatpush1.msra.mxu0 0.0
  %196 = vmatprep.subr.mxu0 0.0
  %197 = vmatpush1.msra.mxu0 0.0
  %198 = vmatprep.subr.mxu0 0.0
  %199 = vmatpush1.msra.mxu0 0.0
  %200 = vmatprep.subr.mxu0 0.0
  %201 = vmatpush1.msra.mxu0 0.0
  %202 = vmatprep.subr.mxu0 0.0
  %203 = vmatpush1.msra.mxu0 0.0
  %204 = vmatprep.subr.mxu0 0.0
  %205 = vmatpush1.msra.mxu0 0.0
  %206 = vmatprep.subr.mxu0 0.0
  %207 = vmatpush1.msra.mxu0 0.0
  %208 = vmatprep.subr.mxu0 0.0
  %209 = vmatpush1.msra.mxu0 0.0
  %210 = vmatprep.subr.mxu0 0.0
  %211 = vmatpush1.msra.mxu0 0.0
  %212 = vmatprep.subr.mxu0 0.0
  %213 = vmatpush1.msra.mxu0 0.0
  %214 = vmatprep.subr.mxu0 0.0
  %215 = vmatpush1.msra.mxu0 0.0
  %216 = vmatprep.subr.mxu0 0.0
  %217 = vmatpush1.msra.mxu0 0.0
  %218 = vmatprep.subr.mxu0 0.0
  %219 = vmatpush1.msra.mxu0 0.0
  %220 = vmatprep.subr.mxu0 0.0
  %221 = vmatpush1.msra.mxu0 0.0
  %222 = vmatprep.subr.mxu0 0.0
  %223 = vmatpush1.msra.mxu0 0.0
  %224 = vmatprep.subr.mxu0 0.0
  %225 = vmatpush1.msra.mxu0 0.0
  %226 = vmatprep.subr.mxu0 0.0
  %227 = vmatpush1.msra.mxu0 0.0
  %228 = vmatprep.subr.mxu0 0.0
  %229 = vmatpush1.msra.mxu0 0.0
  %230 = vmatprep.mubr.f32.mxu0 0.0
  %231 = vmatmul.mubr.f32.gmra.mrb[0].mxu0 %v71
  %v232 = vpop.f32.mrb[0].mxu0
  %v233 = vadd.f32 %v67, %v232
  %v234 = vpop.f32.mrb[0].mxu0
  %235 = vmatprep.mubr.f32.mxu0 0.0
  %236 = vmatmul.mubr.f32.gmra.mrb[0].mxu0 %v74
  %v237 = vpop.f32.mrb[0].mxu0
  %v238 = vadd.f32 %v67, %v237
  %v239 = vpop.f32.mrb[0].mxu0
  %240 = vmatprep.mubr.f32.mxu0 0.0
  %241 = vmatmul.mubr.f32.gmra.mrb[0].mxu0 %v77
  %v242 = vpop.f32.mrb[0].mxu0
  %v243 = vadd.f32 %v67, %v242
  %v244 = vpop.f32.mrb[0].mxu0
  %245 = vmatprep.mubr.f32.mxu0 0.0
  %246 = vmatmul.mubr.f32.gmra.mrb[0].mxu0 %v80
  %v247 = vpop.f32.mrb[0].mxu0
  %v248 = vadd.f32 %v67, %v247
  %v249 = vpop.f32.mrb[0].mxu0
  %250 = vmatprep.mubr.f32.mxu0 0.0
  %251 = vmatmul.mubr.f32.gmra.mrb[0].mxu0 %v83
  %v252 = vpop.f32.mrb[0].mxu0
  %v253 = vadd.f32 %v67, %v252
  %v254 = vpop.f32.mrb[0].mxu0
  %255 = vmatprep.mubr.f32.mxu0 0.0
  %256 = vmatmul.mubr.f32.gmra.mrb[0].mxu0 %v86
  %v257 = vpop.f32.mrb[0].mxu0
  %v258 = vadd.f32 %v67, %v257
  %v259 = vpop.f32.mrb[0].mxu0
  %260 = vmatprep.mubr.f32.mxu0 0.0
  %261 = vmatmul.mubr.f32.gmra.mrb[0].mxu0 %v89
  %v262 = vpop.f32.mrb[0].mxu0
  %v263 = vadd.f32 %v67, %v262
  %v264 = vpop.f32.mrb[0].mxu0
  %265 = vmatprep.mubr.f32.mxu0 0.0
  %266 = vmatmul.mubr.f32.gmra.mrb[0].mxu0 %v92
  %v267 = vpop.f32.mrb[0].mxu0
  %v268 = vadd.f32 %v67, %v267
  %v269 = vpop.f32.mrb[0].mxu0
  %270 = vmatprep.mubr.f32.mxu0 0.0
  %271 = vmatmul.mubr.f32.gmra.mrb[0].mxu0 %v95
  %v272 = vpop.f32.mrb[0].mxu0
  %v273 = vadd.f32 %v67, %v272
  %v274 = vpop.f32.mrb[0].mxu0
  %275 = vmatprep.mubr.f32.mxu0 0.0
  %276 = vmatmul.mubr.f32.gmra.mrb[0].mxu0 %v98
  %v277 = vpop.f32.mrb[0].mxu0
  %v278 = vadd.f32 %v67, %v277
  %v279 = vpop.f32.mrb[0].mxu0
  %280 = vmatprep.mubr.f32.mxu0 0.0
  %281 = vmatmul.mubr.f32.gmra.mrb[0].mxu0 %v101
  %v282 = vpop.f32.mrb[0].mxu0
  %v283 = vadd.f32 %v67, %v282
  %v284 = vpop.f32.mrb[0].mxu0
  %285 = vmatprep.mubr.f32.mxu0 0.0
  %286 = vmatmul.mubr.f32.gmra.mrb[0].mxu0 %v104
  %v287 = vpop.f32.mrb[0].mxu0
  %v288 = vadd.f32 %v67, %v287
  %v289 = vpop.f32.mrb[0].mxu0
  %290 = vmatprep.mubr.f32.mxu0 0.0
  %291 = vmatmul.mubr.f32.gmra.mrb[0].mxu0 %v107
  %v292 = vpop.f32.mrb[0].mxu0
  %v293 = vadd.f32 %v67, %v292
  %v294 = vpop.f32.mrb[0].mxu0
  %295 = vmatprep.mubr.f32.mxu0 0.0
  %296 = vmatmul.mubr.f32.gmra.mrb[0].mxu0 %v110
  %v297 = vpop.f32.mrb[0].mxu0
  %v298 = vadd.f32 %v67, %v297
  %v299 = vpop.f32.mrb[0].mxu0
  %300 = vmatprep.mubr.f32.mxu0 0.0
  %301 = vmatmul.mubr.f32.gmra.mrb[0].mxu0 %v113
  %v302 = vpop.f32.mrb[0].mxu0
  %v303 = vadd.f32 %v67, %v302
  %v304 = vpop.f32.mrb[0].mxu0
  %305 = vmatprep.mubr.f32.mxu0 0.0
  %306 = vmatmul.mubr.f32.gmra.mrb[0].mxu0 %v116
  %v307 = vpop.f32.mrb[0].mxu0
  %v308 = vadd.f32 %v67, %v307
  %v309 = vpop.f32.mrb[0].mxu0
  %310 = vmatprep.mubr.f32.mxu0 0.0
  %311 = vmatmul.mubr.f32.gmra.mrb[0].mxu0 %v119
  %v312 = vpop.f32.mrb[0].mxu0
  %v313 = vadd.f32 %v67, %v312
  %v314 = vpop.f32.mrb[0].mxu0
  %315 = vmatprep.mubr.f32.mxu0 0.0
  %316 = vmatmul.mubr.f32.gmra.mrb[0].mxu0 %v122
  %v317 = vpop.f32.mrb[0].mxu0
  %v318 = vadd.f32 %v67, %v317
  %v319 = vpop.f32.mrb[0].mxu0
  %320 = vmatprep.mubr.f32.mxu0 0.0
  %321 = vmatmul.mubr.f32.gmra.mrb[0].mxu0 %v125
  %v322 = vpop.f32.mrb[0].mxu0
  %v323 = vadd.f32 %v67, %v322
  %v324 = vpop.f32.mrb[0].mxu0
  %325 = vmatprep.mubr.f32.mxu0 0.0
  %326 = vmatmul.mubr.f32.gmra.mrb[0].mxu0 %v128
  %v327 = vpop.f32.mrb[0].mxu0
  %v328 = vadd.f32 %v67, %v327
  %v329 = vpop.f32.mrb[0].mxu0
  %330 = vmatprep.mubr.f32.mxu0 0.0
  %331 = vmatmul.mubr.f32.gmra.mrb[0].mxu0 %v131
  %v332 = vpop.f32.mrb[0].mxu0
  %v333 = vadd.f32 %v67, %v332
  %v334 = vpop.f32.mrb[0].mxu0
  %335 = vmatprep.mubr.f32.mxu0 0.0
  %336 = vmatmul.mubr.f32.gmra.mrb[0].mxu0 %v134
  %v337 = vpop.f32.mrb[0].mxu0
  %v338 = vadd.f32 %v67, %v337
  %v339 = vpop.f32.mrb[0].mxu0
  %340 = vmatprep.mubr.f32.mxu0 0.0
  %341 = vmatmul.mubr.f32.gmra.mrb[0].mxu0 %v137
  %v342 = vpop.f32.mrb[0].mxu0
  %v343 = vadd.f32 %v67, %v342
  %v344 = vpop.f32.mrb[0].mxu0
  %345 = vmatprep.mubr.f32.mxu0 0.0
  %346 = vmatmul.mubr.f32.gmra.mrb[0].mxu0 %v140
  %v347 = vpop.f32.mrb[0].mxu0
  %v348 = vadd.f32 %v67, %v347
  %v349 = vpop.f32.mrb[0].mxu0
  %350 = vmatprep.mubr.f32.mxu0 0.0
  %351 = vmatmul.mubr.f32.gmra.mrb[0].mxu0 %v143
  %v352 = vpop.f32.mrb[0].mxu0
  %v353 = vadd.f32 %v67, %v352
  %v354 = vpop.f32.mrb[0].mxu0
  %355 = vmatprep.mubr.f32.mxu0 0.0
  %356 = vmatmul.mubr.f32.gmra.mrb[0].mxu0 %v146
  %v357 = vpop.f32.mrb[0].mxu0
  %v358 = vadd.f32 %v67, %v357
  %v359 = vpop.f32.mrb[0].mxu0
  %360 = vmatprep.mubr.f32.mxu0 0.0
  %361 = vmatmul.mubr.f32.gmra.mrb[0].mxu0 %v149
  %v362 = vpop.f32.mrb[0].mxu0
  %v363 = vadd.f32 %v67, %v362
  %v364 = vpop.f32.mrb[0].mxu0
  %365 = vmatprep.mubr.f32.mxu0 0.0
  %366 = vmatmul.mubr.f32.gmra.mrb[0].mxu0 %v152
  %v367 = vpop.f32.mrb[0].mxu0
  %v368 = vadd.f32 %v67, %v367
  %v369 = vpop.f32.mrb[0].mxu0
  %370 = vmatprep.mubr.f32.mxu0 0.0
  %371 = vmatmul.mubr.f32.gmra.mrb[0].mxu0 %v155
  %v372 = vpop.f32.mrb[0].mxu0
  %v373 = vadd.f32 %v67, %v372
  %v374 = vpop.f32.mrb[0].mxu0
  %375 = vmatprep.mubr.f32.mxu0 0.0
  %376 = vmatmul.mubr.f32.gmra.mrb[0].mxu0 %v158
  %v377 = vpop.f32.mrb[0].mxu0
  %v378 = vadd.f32 %v67, %v377
  %v379 = vpop.f32.mrb[0].mxu0
  %380 = vmatprep.mubr.f32.mxu0 0.0
  %381 = vmatmul.mubr.f32.gmra.mrb[0].mxu0 %v161
  %v382 = vpop.f32.mrb[0].mxu0
  %v383 = vadd.f32 %v67, %v382
  %v384 = vpop.f32.mrb[0].mxu0
  %385 = vmatprep.mubr.f32.mxu0 0.0
  %386 = vmatmul.mubr.f32.gmra.mrb[0].mxu0 %v164
  %v387 = vpop.f32.mrb[0].mxu0
  %v388 = vadd.f32 %v67, %v387
  %v389 = vpop.f32.mrb[0].mxu0
  %390 = vdwg.mxu0
  %v391 = vmax.f32 %v233, 0.0
  %v392 = vmax.f32 %v238, 0.0
  %v393 = vmax.f32 %v243, 0.0
  %v394 = vmax.f32 %v248, 0.0
  %v395 = vmax.f32 %v253, 0.0
  %v396 = vmax.f32 %v258, 0.0
  %v397 = vmax.f32 %v263, 0.0
  %v398 = vmax.f32 %v268, 0.0
  %v399 = vmax.f32 %v273, 0.0
  %v400 = vmax.f32 %v278, 0.0
  %v401 = vmax.f32 %v283, 0.0
  %v402 = vmax.f32 %v288, 0.0
  %v403 = vmax.f32 %v293, 0.0
  %v404 = vmax.f32 %v298, 0.0
  %v405 = vmax.f32 %v303, 0.0
  %v406 = vmax.f32 %v308, 0.0
  %v407 = vmax.f32 %v313, 0.0
  %v408 = vmax.f32 %v318, 0.0
  %v409 = vmax.f32 %v323, 0.0
  %v410 = vmax.f32 %v328, 0.0
  %v411 = vmax.f32 %v333, 0.0
  %v412 = vmax.f32 %v338, 0.0
  %v413 = vmax.f32 %v343, 0.0
  %v414 = vmax.f32 %v348, 0.0
  %v415 = vmax.f32 %v353, 0.0
  %v416 = vmax.f32 %v358, 0.0
  %v417 = vmax.f32 %v363, 0.0
  %v418 = vmax.f32 %v368, 0.0
  %v419 = vmax.f32 %v373, 0.0
  %v420 = vmax.f32 %v378, 0.0
  %v421 = vmax.f32 %v383, 0.0
  %v422 = vmax.f32 %v388, 0.0
  %v423 = vld [vmem:[%s3] sm:$0xff]
  %v424 = vld [vmem:[%s3 + $0x8] sm:$0xff]
  %v425 = vld [vmem:[%s3 + $0x10] sm:$0xff]
  %v426 = vld [vmem:[%s3 + $0x18] sm:$0xff]
  %v427 = vld [vmem:[%s3 + $0x20] sm:$0xff]
  %v428 = vld [vmem:[%s3 + $0x28] sm:$0xff]
  %v429 = vld [vmem:[%s3 + $0x30] sm:$0xff]
  %v430 = vld [vmem:[%s3 + $0x38] sm:$0xff]
  %v431 = vld [vmem:[%s3 + $0x40] sm:$0xff]
  %v432 = vld [vmem:[%s3 + $0x48] sm:$0xff]
  %v433 = vld [vmem:[%s3 + $0x50] sm:$0xff]
  %v434 = vld [vmem:[%s3 + $0x58] sm:$0xff]
  %v435 = vld [vmem:[%s3 + $0x60] sm:$0xff]
  %v436 = vld [vmem:[%s3 + $0x68] sm:$0xff]
  %v437 = vld [vmem:[%s3 + $0x70] sm:$0xff]
  %v438 = vld [vmem:[%s3 + $0x78] sm:$0xff]
  %v439 = vld [vmem:[%s4] sm:$0x1]
  %v441 = vlaneseq
  %v442 = vshrl.u32 %v441, 7
  %v443 = vsub.s32 0, %v442
  %v444 = vrot.slane %v439, %v443
  %446 = vmatprep.subr.mxu0 0.0
  %447 = vmatpush1.msra.mxu0 %v423
  %448 = vmatprep.subr.mxu0 0.0
  %449 = vmatpush1.msra.mxu0 %v424
  %450 = vmatprep.subr.mxu0 0.0
  %451 = vmatpush1.msra.mxu0 %v425
  %452 = vmatprep.subr.mxu0 0.0
  %453 = vmatpush1.msra.mxu0 %v426
  %454 = vmatprep.subr.mxu0 0.0
  %455 = vmatpush1.msra.mxu0 %v427
  %456 = vmatprep.subr.mxu0 0.0
  %457 = vmatpush1.msra.mxu0 %v428
  %458 = vmatprep.subr.mxu0 0.0
  %459 = vmatpush1.msra.mxu0 %v429
  %460 = vmatprep.subr.mxu0 0.0
  %461 = vmatpush1.msra.mxu0 %v430
  %462 = vmatprep.subr.mxu0 0.0
  %463 = vmatpush1.msra.mxu0 %v431
  %464 = vmatprep.subr.mxu0 0.0
  %465 = vmatpush1.msra.mxu0 %v432
  %466 = vmatprep.subr.mxu0 0.0
  %467 = vmatpush1.msra.mxu0 %v433
  %468 = vmatprep.subr.mxu0 0.0
  %469 = vmatpush1.msra.mxu0 %v434
  %470 = vmatprep.subr.mxu0 0.0
  %471 = vmatpush1.msra.mxu0 %v435
  %472 = vmatprep.subr.mxu0 0.0
  %473 = vmatpush1.msra.mxu0 %v436
  %474 = vmatprep.subr.mxu0 0.0
  %475 = vmatpush1.msra.mxu0 %v437
  %476 = vmatprep.subr.mxu0 0.0
  %477 = vmatpush1.msra.mxu0 %v438
  %478 = vmatprep.subr.mxu0 0.0
  %479 = vmatpush1.msra.mxu0 0.0
  %480 = vmatprep.subr.mxu0 0.0
  %481 = vmatpush1.msra.mxu0 0.0
  %482 = vmatprep.subr.mxu0 0.0
  %483 = vmatpush1.msra.mxu0 0.0
  %484 = vmatprep.subr.mxu0 0.0
  %485 = vmatpush1.msra.mxu0 0.0
  %486 = vmatprep.subr.mxu0 0.0
  %487 = vmatpush1.msra.mxu0 0.0
  %488 = vmatprep.subr.mxu0 0.0
  %489 = vmatpush1.msra.mxu0 0.0
  %490 = vmatprep.subr.mxu0 0.0
  %491 = vmatpush1.msra.mxu0 0.0
  %492 = vmatprep.subr.mxu0 0.0
  %493 = vmatpush1.msra.mxu0 0.0
  %494 = vmatprep.subr.mxu0 0.0
  %495 = vmatpush1.msra.mxu0 0.0
  %496 = vmatprep.subr.mxu0 0.0
  %497 = vmatpush1.msra.mxu0 0.0
  %498 = vmatprep.subr.mxu0 0.0
  %499 = vmatpush1.msra.mxu0 0.0
  %500 = vmatprep.subr.mxu0 0.0
  %501 = vmatpush1.msra.mxu0 0.0
  %502 = vmatprep.subr.mxu0 0.0
  %503 = vmatpush1.msra.mxu0 0.0
  %504 = vmatprep.subr.mxu0 0.0
  %505 = vmatpush1.msra.mxu0 0.0
  %506 = vmatprep.subr.mxu0 0.0
  %507 = vmatpush1.msra.mxu0 0.0
  %508 = vmatprep.subr.mxu0 0.0
  %509 = vmatpush1.msra.mxu0 0.0
  %510 = vmatprep.mubr.f32.mxu0 0.0
  %511 = vmatmul.mubr.f32.gmra.mrb[0].mxu0 %v391
  %v512 = vpop.f32.mrb[0].mxu0
  %v513 = vadd.f32 %v444, %v512
  %v514 = vpop.f32.mrb[0].mxu0
  %515 = vmatprep.mubr.f32.mxu0 0.0
  %516 = vmatmul.mubr.f32.gmra.mrb[0].mxu0 %v392
  %v517 = vpop.f32.mrb[0].mxu0
  %v518 = vadd.f32 %v444, %v517
  %v519 = vpop.f32.mrb[0].mxu0
  %520 = vmatprep.mubr.f32.mxu0 0.0
  %521 = vmatmul.mubr.f32.gmra.mrb[0].mxu0 %v393
  %v522 = vpop.f32.mrb[0].mxu0
  %v523 = vadd.f32 %v444, %v522
  %v524 = vpop.f32.mrb[0].mxu0
  %525 = vmatprep.mubr.f32.mxu0 0.0
  %526 = vmatmul.mubr.f32.gmra.mrb[0].mxu0 %v394
  %v527 = vpop.f32.mrb[0].mxu0
  %v528 = vadd.f32 %v444, %v527
  %v529 = vpop.f32.mrb[0].mxu0
  %530 = vmatprep.mubr.f32.mxu0 0.0
  %531 = vmatmul.mubr.f32.gmra.mrb[0].mxu0 %v395
  %v532 = vpop.f32.mrb[0].mxu0
  %v533 = vadd.f32 %v444, %v532
  %v534 = vpop.f32.mrb[0].mxu0
  %535 = vmatprep.mubr.f32.mxu0 0.0
  %536 = vmatmul.mubr.f32.gmra.mrb[0].mxu0 %v396
  %v537 = vpop.f32.mrb[0].mxu0
  %v538 = vadd.f32 %v444, %v537
  %v539 = vpop.f32.mrb[0].mxu0
  %540 = vmatprep.mubr.f32.mxu0 0.0
  %541 = vmatmul.mubr.f32.gmra.mrb[0].mxu0 %v397
  %v542 = vpop.f32.mrb[0].mxu0
  %v543 = vadd.f32 %v444, %v542
  %v544 = vpop.f32.mrb[0].mxu0
  %545 = vmatprep.mubr.f32.mxu0 0.0
  %546 = vmatmul.mubr.f32.gmra.mrb[0].mxu0 %v398
  %v547 = vpop.f32.mrb[0].mxu0
  %v548 = vadd.f32 %v444, %v547
  %v549 = vpop.f32.mrb[0].mxu0
  %550 = vmatprep.mubr.f32.mxu0 0.0
  %551 = vmatmul.mubr.f32.gmra.mrb[0].mxu0 %v399
  %v552 = vpop.f32.mrb[0].mxu0
  %v553 = vadd.f32 %v444, %v552
  %v554 = vpop.f32.mrb[0].mxu0
  %555 = vmatprep.mubr.f32.mxu0 0.0
  %556 = vmatmul.mubr.f32.gmra.mrb[0].mxu0 %v400
  %v557 = vpop.f32.mrb[0].mxu0
  %v558 = vadd.f32 %v444, %v557
  %v559 = vpop.f32.mrb[0].mxu0
  %560 = vmatprep.mubr.f32.mxu0 0.0
  %561 = vmatmul.mubr.f32.gmra.mrb[0].mxu0 %v401
  %v562 = vpop.f32.mrb[0].mxu0
  %v563 = vadd.f32 %v444, %v562
  %v564 = vpop.f32.mrb[0].mxu0
  %565 = vmatprep.mubr.f32.mxu0 0.0
  %566 = vmatmul.mubr.f32.gmra.mrb[0].mxu0 %v402
  %v567 = vpop.f32.mrb[0].mxu0
  %v568 = vadd.f32 %v444, %v567
  %v569 = vpop.f32.mrb[0].mxu0
  %570 = vmatprep.mubr.f32.mxu0 0.0
  %571 = vmatmul.mubr.f32.gmra.mrb[0].mxu0 %v403
  %v572 = vpop.f32.mrb[0].mxu0
  %v573 = vadd.f32 %v444, %v572
  %v574 = vpop.f32.mrb[0].mxu0
  %575 = vmatprep.mubr.f32.mxu0 0.0
  %576 = vmatmul.mubr.f32.gmra.mrb[0].mxu0 %v404
  %v577 = vpop.f32.mrb[0].mxu0
  %v578 = vadd.f32 %v444, %v577
  %v579 = vpop.f32.mrb[0].mxu0
  %580 = vmatprep.mubr.f32.mxu0 0.0
  %581 = vmatmul.mubr.f32.gmra.mrb[0].mxu0 %v405
  %v582 = vpop.f32.mrb[0].mxu0
  %v583 = vadd.f32 %v444, %v582
  %v584 = vpop.f32.mrb[0].mxu0
  %585 = vmatprep.mubr.f32.mxu0 0.0
  %586 = vmatmul.mubr.f32.gmra.mrb[0].mxu0 %v406
  %v587 = vpop.f32.mrb[0].mxu0
  %v588 = vadd.f32 %v444, %v587
  %v589 = vpop.f32.mrb[0].mxu0
  %590 = vmatprep.mubr.f32.mxu0 0.0
  %591 = vmatmul.mubr.f32.gmra.mrb[0].mxu0 %v407
  %v592 = vpop.f32.mrb[0].mxu0
  %v593 = vadd.f32 %v444, %v592
  %v594 = vpop.f32.mrb[0].mxu0
  %595 = vmatprep.mubr.f32.mxu0 0.0
  %596 = vmatmul.mubr.f32.gmra.mrb[0].mxu0 %v408
  %v597 = vpop.f32.mrb[0].mxu0
  %v598 = vadd.f32 %v444, %v597
  %v599 = vpop.f32.mrb[0].mxu0
  %600 = vmatprep.mubr.f32.mxu0 0.0
  %601 = vmatmul.mubr.f32.gmra.mrb[0].mxu0 %v409
  %v602 = vpop.f32.mrb[0].mxu0
  %v603 = vadd.f32 %v444, %v602
  %v604 = vpop.f32.mrb[0].mxu0
  %605 = vmatprep.mubr.f32.mxu0 0.0
  %606 = vmatmul.mubr.f32.gmra.mrb[0].mxu0 %v410
  %v607 = vpop.f32.mrb[0].mxu0
  %v608 = vadd.f32 %v444, %v607
  %v609 = vpop.f32.mrb[0].mxu0
  %610 = vmatprep.mubr.f32.mxu0 0.0
  %611 = vmatmul.mubr.f32.gmra.mrb[0].mxu0 %v411
  %v612 = vpop.f32.mrb[0].mxu0
  %v613 = vadd.f32 %v444, %v612
  %v614 = vpop.f32.mrb[0].mxu0
  %615 = vmatprep.mubr.f32.mxu0 0.0
  %616 = vmatmul.mubr.f32.gmra.mrb[0].mxu0 %v412
  %v617 = vpop.f32.mrb[0].mxu0
  %v618 = vadd.f32 %v444, %v617
  %v619 = vpop.f32.mrb[0].mxu0
  %620 = vmatprep.mubr.f32.mxu0 0.0
  %621 = vmatmul.mubr.f32.gmra.mrb[0].mxu0 %v413
  %v622 = vpop.f32.mrb[0].mxu0
  %v623 = vadd.f32 %v444, %v622
  %v624 = vpop.f32.mrb[0].mxu0
  %625 = vmatprep.mubr.f32.mxu0 0.0
  %626 = vmatmul.mubr.f32.gmra.mrb[0].mxu0 %v414
  %v627 = vpop.f32.mrb[0].mxu0
  %v628 = vadd.f32 %v444, %v627
  %v629 = vpop.f32.mrb[0].mxu0
  %630 = vmatprep.mubr.f32.mxu0 0.0
  %631 = vmatmul.mubr.f32.gmra.mrb[0].mxu0 %v415
  %v632 = vpop.f32.mrb[0].mxu0
  %v633 = vadd.f32 %v444, %v632
  %v634 = vpop.f32.mrb[0].mxu0
  %635 = vmatprep.mubr.f32.mxu0 0.0
  %636 = vmatmul.mubr.f32.gmra.mrb[0].mxu0 %v416
  %v637 = vpop.f32.mrb[0].mxu0
  %v638 = vadd.f32 %v444, %v637
  %v639 = vpop.f32.mrb[0].mxu0
  %640 = vmatprep.mubr.f32.mxu0 0.0
  %641 = vmatmul.mubr.f32.gmra.mrb[0].mxu0 %v417
  %v642 = vpop.f32.mrb[0].mxu0
  %v643 = vadd.f32 %v444, %v642
  %v644 = vpop.f32.mrb[0].mxu0
  %645 = vmatprep.mubr.f32.mxu0 0.0
  %646 = vmatmul.mubr.f32.gmra.mrb[0].mxu0 %v418
  %v647 = vpop.f32.mrb[0].mxu0
  %v648 = vadd.f32 %v444, %v647
  %v649 = vpop.f32.mrb[0].mxu0
  %650 = vmatprep.mubr.f32.mxu0 0.0
  %651 = vmatmul.mubr.f32.gmra.mrb[0].mxu0 %v419
  %v652 = vpop.f32.mrb[0].mxu0
  %v653 = vadd.f32 %v444, %v652
  %v654 = vpop.f32.mrb[0].mxu0
  %655 = vmatprep.mubr.f32.mxu0 0.0
  %656 = vmatmul.mubr.f32.gmra.mrb[0].mxu0 %v420
  %v657 = vpop.f32.mrb[0].mxu0
  %v658 = vadd.f32 %v444, %v657
  %v659 = vpop.f32.mrb[0].mxu0
  %660 = vmatprep.mubr.f32.mxu0 0.0
  %661 = vmatmul.mubr.f32.gmra.mrb[0].mxu0 %v421
  %v662 = vpop.f32.mrb[0].mxu0
  %v663 = vadd.f32 %v444, %v662
  %v664 = vpop.f32.mrb[0].mxu0
  %665 = vmatprep.mubr.f32.mxu0 0.0
  %666 = vmatmul.mubr.f32.gmra.mrb[0].mxu0 %v422
  %v667 = vpop.f32.mrb[0].mxu0
  %v668 = vadd.f32 %v444, %v667
  %v669 = vpop.f32.mrb[0].mxu0
  %670 = vdwg.mxu0
  %v671 = vmax.f32 %v513, 0.0
  %v672 = vmax.f32 %v518, 0.0
  %v673 = vmax.f32 %v523, 0.0
  %v674 = vmax.f32 %v528, 0.0
  %v675 = vmax.f32 %v533, 0.0
  %v676 = vmax.f32 %v538, 0.0
  %v677 = vmax.f32 %v543, 0.0
  %v678 = vmax.f32 %v548, 0.0
  %v679 = vmax.f32 %v553, 0.0
  %v680 = vmax.f32 %v558, 0.0
  %v681 = vmax.f32 %v563, 0.0
  %v682 = vmax.f32 %v568, 0.0
  %v683 = vmax.f32 %v573, 0.0
  %v684 = vmax.f32 %v578, 0.0
  %v685 = vmax.f32 %v583, 0.0
  %v686 = vmax.f32 %v588, 0.0
  %v687 = vmax.f32 %v593, 0.0
  %v688 = vmax.f32 %v598, 0.0
  %v689 = vmax.f32 %v603, 0.0
  %v690 = vmax.f32 %v608, 0.0
  %v691 = vmax.f32 %v613, 0.0
  %v692 = vmax.f32 %v618, 0.0
  %v693 = vmax.f32 %v623, 0.0
  %v694 = vmax.f32 %v628, 0.0
  %v695 = vmax.f32 %v633, 0.0
  %v696 = vmax.f32 %v638, 0.0
  %v697 = vmax.f32 %v643, 0.0
  %v698 = vmax.f32 %v648, 0.0
  %v699 = vmax.f32 %v653, 0.0
  %v700 = vmax.f32 %v658, 0.0
  %v701 = vmax.f32 %v663, 0.0
  %v702 = vmax.f32 %v668, 0.0
  %v703 = vld [vmem:[%s5] sm:$0xff]
  %v704 = vld [vmem:[%s5 + $0x8] sm:$0xff]
  %v705 = vld [vmem:[%s5 + $0x10] sm:$0xff]
  %v706 = vld [vmem:[%s5 + $0x18] sm:$0xff]
  %v707 = vld [vmem:[%s5 + $0x20] sm:$0xff]
  %v708 = vld [vmem:[%s5 + $0x28] sm:$0xff]
  %v709 = vld [vmem:[%s5 + $0x30] sm:$0xff]
  %v710 = vld [vmem:[%s5 + $0x38] sm:$0xff]
  %v711 = vld [vmem:[%s6] sm:$0x1]
  %v713 = vlaneseq
  %v714 = vshrl.u32 %v713, 7
  %v715 = vsub.s32 0, %v714
  %v716 = vrot.slane %v711, %v715
  %vm718 = vcmask 523264
  %v720 = vsel %vm718, %v671, 0
  %v723 = vsel %vm718, %v672, 0
  %v726 = vsel %vm718, %v673, 0
  %v729 = vsel %vm718, %v674, 0
  %v732 = vsel %vm718, %v675, 0
  %v735 = vsel %vm718, %v676, 0
  %v738 = vsel %vm718, %v677, 0
  %v741 = vsel %vm718, %v678, 0
  %v744 = vsel %vm718, %v679, 0
  %v747 = vsel %vm718, %v680, 0
  %v750 = vsel %vm718, %v681, 0
  %v753 = vsel %vm718, %v682, 0
  %v756 = vsel %vm718, %v683, 0
  %v759 = vsel %vm718, %v684, 0
  %v762 = vsel %vm718, %v685, 0
  %v765 = vsel %vm718, %v686, 0
  %v768 = vsel %vm718, %v687, 0
  %v771 = vsel %vm718, %v688, 0
  %v774 = vsel %vm718, %v689, 0
  %v777 = vsel %vm718, %v690, 0
  %v780 = vsel %vm718, %v691, 0
  %v783 = vsel %vm718, %v692, 0
  %v786 = vsel %vm718, %v693, 0
  %v789 = vsel %vm718, %v694, 0
  %v792 = vsel %vm718, %v695, 0
  %v795 = vsel %vm718, %v696, 0
  %v798 = vsel %vm718, %v697, 0
  %v801 = vsel %vm718, %v698, 0
  %v804 = vsel %vm718, %v699, 0
  %v807 = vsel %vm718, %v700, 0
  %v810 = vsel %vm718, %v701, 0
  %v813 = vsel %vm718, %v702, 0
  %815 = vmatprep.subr.mxu0 0.0
  %816 = vmatpush1.msra.mxu0 %v703
  %817 = vmatprep.subr.mxu0 0.0
  %818 = vmatpush1.msra.mxu0 %v704
  %819 = vmatprep.subr.mxu0 0.0
  %820 = vmatpush1.msra.mxu0 %v705
  %821 = vmatprep.subr.mxu0 0.0
  %822 = vmatpush1.msra.mxu0 %v706
  %823 = vmatprep.subr.mxu0 0.0
  %824 = vmatpush1.msra.mxu0 %v707
  %825 = vmatprep.subr.mxu0 0.0
  %826 = vmatpush1.msra.mxu0 %v708
  %827 = vmatprep.subr.mxu0 0.0
  %828 = vmatpush1.msra.mxu0 %v709
  %829 = vmatprep.subr.mxu0 0.0
  %830 = vmatpush1.msra.mxu0 %v710
  %831 = vmatprep.subr.mxu0 0.0
  %832 = vmatpush1.msra.mxu0 0.0
  %833 = vmatprep.subr.mxu0 0.0
  %834 = vmatpush1.msra.mxu0 0.0
  %835 = vmatprep.subr.mxu0 0.0
  %836 = vmatpush1.msra.mxu0 0.0
  %837 = vmatprep.subr.mxu0 0.0
  %838 = vmatpush1.msra.mxu0 0.0
  %839 = vmatprep.subr.mxu0 0.0
  %840 = vmatpush1.msra.mxu0 0.0
  %841 = vmatprep.subr.mxu0 0.0
  %842 = vmatpush1.msra.mxu0 0.0
  %843 = vmatprep.subr.mxu0 0.0
  %844 = vmatpush1.msra.mxu0 0.0
  %845 = vmatprep.subr.mxu0 0.0
  %846 = vmatpush1.msra.mxu0 0.0
  %847 = vmatprep.subr.mxu0 0.0
  %848 = vmatpush1.msra.mxu0 0.0
  %849 = vmatprep.subr.mxu0 0.0
  %850 = vmatpush1.msra.mxu0 0.0
  %851 = vmatprep.subr.mxu0 0.0
  %852 = vmatpush1.msra.mxu0 0.0
  %853 = vmatprep.subr.mxu0 0.0
  %854 = vmatpush1.msra.mxu0 0.0
  %855 = vmatprep.subr.mxu0 0.0
  %856 = vmatpush1.msra.mxu0 0.0
  %857 = vmatprep.subr.mxu0 0.0
  %858 = vmatpush1.msra.mxu0 0.0
  %859 = vmatprep.subr.mxu0 0.0
  %860 = vmatpush1.msra.mxu0 0.0
  %861 = vmatprep.subr.mxu0 0.0
  %862 = vmatpush1.msra.mxu0 0.0
  %863 = vmatprep.subr.mxu0 0.0
  %864 = vmatpush1.msra.mxu0 0.0
  %865 = vmatprep.subr.mxu0 0.0
  %866 = vmatpush1.msra.mxu0 0.0
  %867 = vmatprep.subr.mxu0 0.0
  %868 = vmatpush1.msra.mxu0 0.0
  %869 = vmatprep.subr.mxu0 0.0
  %870 = vmatpush1.msra.mxu0 0.0
  %871 = vmatprep.subr.mxu0 0.0
  %872 = vmatpush1.msra.mxu0 0.0
  %873 = vmatprep.subr.mxu0 0.0
  %874 = vmatpush1.msra.mxu0 0.0
  %875 = vmatprep.subr.mxu0 0.0
  %876 = vmatpush1.msra.mxu0 0.0
  %877 = vmatprep.subr.mxu0 0.0
  %878 = vmatpush1.msra.mxu0 0.0
  %879 = vmatprep.mubr.f32.mxu0 0.0
  %880 = vmatmul.mubr.f32.gmra.mrb[0].mxu0 %v720
  %v881 = vpop.f32.mrb[0].mxu0
  %v882 = vadd.f32 %v716, %v881
  %v883 = vpop.f32.mrb[0].mxu0
  %884 = vmatprep.mubr.f32.mxu0 0.0
  %885 = vmatmul.mubr.f32.gmra.mrb[0].mxu0 %v723
  %v886 = vpop.f32.mrb[0].mxu0
  %v887 = vadd.f32 %v716, %v886
  %v888 = vpop.f32.mrb[0].mxu0
  %889 = vmatprep.mubr.f32.mxu0 0.0
  %890 = vmatmul.mubr.f32.gmra.mrb[0].mxu0 %v726
  %v891 = vpop.f32.mrb[0].mxu0
  %v892 = vadd.f32 %v716, %v891
  %v893 = vpop.f32.mrb[0].mxu0
  %894 = vmatprep.mubr.f32.mxu0 0.0
  %895 = vmatmul.mubr.f32.gmra.mrb[0].mxu0 %v729
  %v896 = vpop.f32.mrb[0].mxu0
  %v897 = vadd.f32 %v716, %v896
  %v898 = vpop.f32.mrb[0].mxu0
  %899 = vmatprep.mubr.f32.mxu0 0.0
  %900 = vmatmul.mubr.f32.gmra.mrb[0].mxu0 %v732
  %v901 = vpop.f32.mrb[0].mxu0
  %v902 = vadd.f32 %v716, %v901
  %v903 = vpop.f32.mrb[0].mxu0
  %904 = vmatprep.mubr.f32.mxu0 0.0
  %905 = vmatmul.mubr.f32.gmra.mrb[0].mxu0 %v735
  %v906 = vpop.f32.mrb[0].mxu0
  %v907 = vadd.f32 %v716, %v906
  %v908 = vpop.f32.mrb[0].mxu0
  %909 = vmatprep.mubr.f32.mxu0 0.0
  %910 = vmatmul.mubr.f32.gmra.mrb[0].mxu0 %v738
  %v911 = vpop.f32.mrb[0].mxu0
  %v912 = vadd.f32 %v716, %v911
  %v913 = vpop.f32.mrb[0].mxu0
  %914 = vmatprep.mubr.f32.mxu0 0.0
  %915 = vmatmul.mubr.f32.gmra.mrb[0].mxu0 %v741
  %v916 = vpop.f32.mrb[0].mxu0
  %v917 = vadd.f32 %v716, %v916
  %v918 = vpop.f32.mrb[0].mxu0
  %919 = vmatprep.mubr.f32.mxu0 0.0
  %920 = vmatmul.mubr.f32.gmra.mrb[0].mxu0 %v744
  %v921 = vpop.f32.mrb[0].mxu0
  %v922 = vadd.f32 %v716, %v921
  %v923 = vpop.f32.mrb[0].mxu0
  %924 = vmatprep.mubr.f32.mxu0 0.0
  %925 = vmatmul.mubr.f32.gmra.mrb[0].mxu0 %v747
  %v926 = vpop.f32.mrb[0].mxu0
  %v927 = vadd.f32 %v716, %v926
  %v928 = vpop.f32.mrb[0].mxu0
  %929 = vmatprep.mubr.f32.mxu0 0.0
  %930 = vmatmul.mubr.f32.gmra.mrb[0].mxu0 %v750
  %v931 = vpop.f32.mrb[0].mxu0
  %v932 = vadd.f32 %v716, %v931
  %v933 = vpop.f32.mrb[0].mxu0
  %934 = vmatprep.mubr.f32.mxu0 0.0
  %935 = vmatmul.mubr.f32.gmra.mrb[0].mxu0 %v753
  %v936 = vpop.f32.mrb[0].mxu0
  %v937 = vadd.f32 %v716, %v936
  %v938 = vpop.f32.mrb[0].mxu0
  %939 = vmatprep.mubr.f32.mxu0 0.0
  %940 = vmatmul.mubr.f32.gmra.mrb[0].mxu0 %v756
  %v941 = vpop.f32.mrb[0].mxu0
  %v942 = vadd.f32 %v716, %v941
  %v943 = vpop.f32.mrb[0].mxu0
  %944 = vmatprep.mubr.f32.mxu0 0.0
  %945 = vmatmul.mubr.f32.gmra.mrb[0].mxu0 %v759
  %v946 = vpop.f32.mrb[0].mxu0
  %v947 = vadd.f32 %v716, %v946
  %v948 = vpop.f32.mrb[0].mxu0
  %949 = vmatprep.mubr.f32.mxu0 0.0
  %950 = vmatmul.mubr.f32.gmra.mrb[0].mxu0 %v762
  %v951 = vpop.f32.mrb[0].mxu0
  %v952 = vadd.f32 %v716, %v951
  %v953 = vpop.f32.mrb[0].mxu0
  %954 = vmatprep.mubr.f32.mxu0 0.0
  %955 = vmatmul.mubr.f32.gmra.mrb[0].mxu0 %v765
  %v956 = vpop.f32.mrb[0].mxu0
  %v957 = vadd.f32 %v716, %v956
  %v958 = vpop.f32.mrb[0].mxu0
  %959 = vmatprep.mubr.f32.mxu0 0.0
  %960 = vmatmul.mubr.f32.gmra.mrb[0].mxu0 %v768
  %v961 = vpop.f32.mrb[0].mxu0
  %v962 = vadd.f32 %v716, %v961
  %v963 = vpop.f32.mrb[0].mxu0
  %964 = vmatprep.mubr.f32.mxu0 0.0
  %965 = vmatmul.mubr.f32.gmra.mrb[0].mxu0 %v771
  %v966 = vpop.f32.mrb[0].mxu0
  %v967 = vadd.f32 %v716, %v966
  %v968 = vpop.f32.mrb[0].mxu0
  %969 = vmatprep.mubr.f32.mxu0 0.0
  %970 = vmatmul.mubr.f32.gmra.mrb[0].mxu0 %v774
  %v971 = vpop.f32.mrb[0].mxu0
  %v972 = vadd.f32 %v716, %v971
  %v973 = vpop.f32.mrb[0].mxu0
  %974 = vmatprep.mubr.f32.mxu0 0.0
  %975 = vmatmul.mubr.f32.gmra.mrb[0].mxu0 %v777
  %v976 = vpop.f32.mrb[0].mxu0
  %v977 = vadd.f32 %v716, %v976
  %v978 = vpop.f32.mrb[0].mxu0
  %979 = vmatprep.mubr.f32.mxu0 0.0
  %980 = vmatmul.mubr.f32.gmra.mrb[0].mxu0 %v780
  %v981 = vpop.f32.mrb[0].mxu0
  %v982 = vadd.f32 %v716, %v981
  %v983 = vpop.f32.mrb[0].mxu0
  %984 = vmatprep.mubr.f32.mxu0 0.0
  %985 = vmatmul.mubr.f32.gmra.mrb[0].mxu0 %v783
  %v986 = vpop.f32.mrb[0].mxu0
  %v987 = vadd.f32 %v716, %v986
  %v988 = vpop.f32.mrb[0].mxu0
  %989 = vmatprep.mubr.f32.mxu0 0.0
  %990 = vmatmul.mubr.f32.gmra.mrb[0].mxu0 %v786
  %v991 = vpop.f32.mrb[0].mxu0
  %v992 = vadd.f32 %v716, %v991
  %v993 = vpop.f32.mrb[0].mxu0
  %994 = vmatprep.mubr.f32.mxu0 0.0
  %995 = vmatmul.mubr.f32.gmra.mrb[0].mxu0 %v789
  %v996 = vpop.f32.mrb[0].mxu0
  %v997 = vadd.f32 %v716, %v996
  %v998 = vpop.f32.mrb[0].mxu0
  %999 = vmatprep.mubr.f32.mxu0 0.0
  %1000 = vmatmul.mubr.f32.gmra.mrb[0].mxu0 %v792
  %v1001 = vpop.f32.mrb[0].mxu0
  %v1002 = vadd.f32 %v716, %v1001
  %v1003 = vpop.f32.mrb[0].mxu0
  %1004 = vmatprep.mubr.f32.mxu0 0.0
  %1005 = vmatmul.mubr.f32.gmra.mrb[0].mxu0 %v795
  %v1006 = vpop.f32.mrb[0].mxu0
  %v1007 = vadd.f32 %v716, %v1006
  %v1008 = vpop.f32.mrb[0].mxu0
  %1009 = vmatprep.mubr.f32.mxu0 0.0
  %1010 = vmatmul.mubr.f32.gmra.mrb[0].mxu0 %v798
  %v1011 = vpop.f32.mrb[0].mxu0
  %v1012 = vadd.f32 %v716, %v1011
  %v1013 = vpop.f32.mrb[0].mxu0
  %1014 = vmatprep.mubr.f32.mxu0 0.0
  %1015 = vmatmul.mubr.f32.gmra.mrb[0].mxu0 %v801
  %v1016 = vpop.f32.mrb[0].mxu0
  %v1017 = vadd.f32 %v716, %v1016
  %v1018 = vpop.f32.mrb[0].mxu0
  %1019 = vmatprep.mubr.f32.mxu0 0.0
  %1020 = vmatmul.mubr.f32.gmra.mrb[0].mxu0 %v804
  %v1021 = vpop.f32.mrb[0].mxu0
  %v1022 = vadd.f32 %v716, %v1021
  %v1023 = vpop.f32.mrb[0].mxu0
  %1024 = vmatprep.mubr.f32.mxu0 0.0
  %1025 = vmatmul.mubr.f32.gmra.mrb[0].mxu0 %v807
  %v1026 = vpop.f32.mrb[0].mxu0
  %v1027 = vadd.f32 %v716, %v1026
  %v1028 = vpop.f32.mrb[0].mxu0
  %1029 = vmatprep.mubr.f32.mxu0 0.0
  %1030 = vmatmul.mubr.f32.gmra.mrb[0].mxu0 %v810
  %v1031 = vpop.f32.mrb[0].mxu0
  %v1032 = vadd.f32 %v716, %v1031
  %v1033 = vpop.f32.mrb[0].mxu0
  %1034 = vmatprep.mubr.f32.mxu0 0.0
  %1035 = vmatmul.mubr.f32.gmra.mrb[0].mxu0 %v813
  %v1036 = vpop.f32.mrb[0].mxu0
  %v1037 = vadd.f32 %v716, %v1036
  %v1038 = vpop.f32.mrb[0].mxu0
  %1039 = vdwg.mxu0
  %v1040 = vadd.f32 %v882, %v391
  %v1041 = vadd.f32 %v887, %v392
  %v1042 = vadd.f32 %v892, %v393
  %v1043 = vadd.f32 %v897, %v394
  %v1044 = vadd.f32 %v902, %v395
  %v1045 = vadd.f32 %v907, %v396
  %v1046 = vadd.f32 %v912, %v397
  %v1047 = vadd.f32 %v917, %v398
  %v1048 = vadd.f32 %v922, %v399
  %v1049 = vadd.f32 %v927, %v400
  %v1050 = vadd.f32 %v932, %v401
  %v1051 = vadd.f32 %v937, %v402
  %v1052 = vadd.f32 %v942, %v403
  %v1053 = vadd.f32 %v947, %v404
  %v1054 = vadd.f32 %v952, %v405
  %v1055 = vadd.f32 %v957, %v406
  %v1056 = vadd.f32 %v962, %v407
  %v1057 = vadd.f32 %v967, %v408
  %v1058 = vadd.f32 %v972, %v409
  %v1059 = vadd.f32 %v977, %v410
  %v1060 = vadd.f32 %v982, %v411
  %v1061 = vadd.f32 %v987, %v412
  %v1062 = vadd.f32 %v992, %v413
  %v1063 = vadd.f32 %v997, %v414
  %v1064 = vadd.f32 %v1002, %v415
  %v1065 = vadd.f32 %v1007, %v416
  %v1066 = vadd.f32 %v1012, %v417
  %v1067 = vadd.f32 %v1017, %v418
  %v1068 = vadd.f32 %v1022, %v419
  %v1069 = vadd.f32 %v1027, %v420
  %v1070 = vadd.f32 %v1032, %v421
  %v1071 = vadd.f32 %v1037, %v422
  %v1072 = vmax.f32 %v1040, 0.0
  %v1073 = vmax.f32 %v1041, 0.0
  %v1074 = vmax.f32 %v1042, 0.0
  %v1075 = vmax.f32 %v1043, 0.0
  %v1076 = vmax.f32 %v1044, 0.0
  %v1077 = vmax.f32 %v1045, 0.0
  %v1078 = vmax.f32 %v1046, 0.0
  %v1079 = vmax.f32 %v1047, 0.0
  %v1080 = vmax.f32 %v1048, 0.0
  %v1081 = vmax.f32 %v1049, 0.0
  %v1082 = vmax.f32 %v1050, 0.0
  %v1083 = vmax.f32 %v1051, 0.0
  %v1084 = vmax.f32 %v1052, 0.0
  %v1085 = vmax.f32 %v1053, 0.0
  %v1086 = vmax.f32 %v1054, 0.0
  %v1087 = vmax.f32 %v1055, 0.0
  %v1088 = vmax.f32 %v1056, 0.0
  %v1089 = vmax.f32 %v1057, 0.0
  %v1090 = vmax.f32 %v1058, 0.0
  %v1091 = vmax.f32 %v1059, 0.0
  %v1092 = vmax.f32 %v1060, 0.0
  %v1093 = vmax.f32 %v1061, 0.0
  %v1094 = vmax.f32 %v1062, 0.0
  %v1095 = vmax.f32 %v1063, 0.0
  %v1096 = vmax.f32 %v1064, 0.0
  %v1097 = vmax.f32 %v1065, 0.0
  %v1098 = vmax.f32 %v1066, 0.0
  %v1099 = vmax.f32 %v1067, 0.0
  %v1100 = vmax.f32 %v1068, 0.0
  %v1101 = vmax.f32 %v1069, 0.0
  %v1102 = vmax.f32 %v1070, 0.0
  %v1103 = vmax.f32 %v1071, 0.0
  %1104 = vst [vmem:[%s7] sm:$0xff] %v1072
  %1105 = vst [vmem:[%s7 + $0x8] sm:$0xff] %v1073
  %1106 = vst [vmem:[%s7 + $0x10] sm:$0xff] %v1074
  %1107 = vst [vmem:[%s7 + $0x18] sm:$0xff] %v1075
  %1108 = vst [vmem:[%s7 + $0x20] sm:$0xff] %v1076
  %1109 = vst [vmem:[%s7 + $0x28] sm:$0xff] %v1077
  %1110 = vst [vmem:[%s7 + $0x30] sm:$0xff] %v1078
  %1111 = vst [vmem:[%s7 + $0x38] sm:$0xff] %v1079
  %1112 = vst [vmem:[%s7 + $0x40] sm:$0xff] %v1080
  %1113 = vst [vmem:[%s7 + $0x48] sm:$0xff] %v1081
  %1114 = vst [vmem:[%s7 + $0x50] sm:$0xff] %v1082
  %1115 = vst [vmem:[%s7 + $0x58] sm:$0xff] %v1083
  %1116 = vst [vmem:[%s7 + $0x60] sm:$0xff] %v1084
  %1117 = vst [vmem:[%s7 + $0x68] sm:$0xff] %v1085
  %1118 = vst [vmem:[%s7 + $0x70] sm:$0xff] %v1086
  %1119 = vst [vmem:[%s7 + $0x78] sm:$0xff] %v1087
  %1120 = vst [vmem:[%s7 + $0x80] sm:$0xff] %v1088
  %1121 = vst [vmem:[%s7 + $0x88] sm:$0xff] %v1089
  %1122 = vst [vmem:[%s7 + $0x90] sm:$0xff] %v1090
  %1123 = vst [vmem:[%s7 + $0x98] sm:$0xff] %v1091
  %1124 = vst [vmem:[%s7 + $0xa0] sm:$0xff] %v1092
  %1125 = vst [vmem:[%s7 + $0xa8] sm:$0xff] %v1093
  %1126 = vst [vmem:[%s7 + $0xb0] sm:$0xff] %v1094
  %1127 = vst [vmem:[%s7 + $0xb8] sm:$0xff] %v1095
  %1128 = vst [vmem:[%s7 + $0xc0] sm:$0xff] %v1096
  %1129 = vst [vmem:[%s7 + $0xc8] sm:$0xff] %v1097
  %1130 = vst [vmem:[%s7 + $0xd0] sm:$0xff] %v1098
  %1131 = vst [vmem:[%s7 + $0xd8] sm:$0xff] %v1099
  %1132 = vst [vmem:[%s7 + $0xe0] sm:$0xff] %v1100
  %1133 = vst [vmem:[%s7 + $0xe8] sm:$0xff] %v1101
  %1134 = vst [vmem:[%s7 + $0xf0] sm:$0xff] %v1102
  %1135 = vst [vmem:[%s7 + $0xf8] sm:$0xff] %v1103
  // Predicated region
  $region30: #{_resblock_jit.1} parent=0 // pred_check
    _
  $region31: #{_resblock_jit.1} parent=0 // pred_check_branch
    %1137 = sbr.rel (0) target = $region33
  $region32: #{_resblock_jit.1} parent=0 // pred_region
    _
  $region33: #{_resblock_jit.1} parent=0 // pred_fallthru
    _
  // Predicated region
  $region34: #{_resblock_jit.1} parent=0 // pred_check
    _
  $region35: #{_resblock_jit.1} parent=0 // pred_check_branch
    %1139 = sbr.rel (0) target = $region37
  $region36: #{_resblock_jit.1} parent=0 // pred_region
    _
  $region37: #{_resblock_jit.1} parent=0 // pred_fallthru
    _

</llo_original>
